<compile_context>
chip_gen: v7x
topology: tpu7x:2x2x1
jax: 0.10.0
libtpu: 0.0.40
codegen_flags: <defaults>
</compile_context>

<pallas_src>
import jax
import jax.numpy as jnp
from jax.experimental import pallas as pl
from jax.experimental.pallas import tpu as pltpu

_LANE = 128        # TPU lane width
_FPAD = 8          # tiny hidden dim (4) padded to 8 sublanes
_TILE_MAX = 65536  # batch rows per grid step (batch lives on the lane axis)


def _round_up(n, m):
    return ((n + m - 1) // m) * m


# ---------------------------------------------------------------------------
# Pallas kernel: whole forward pass for one batch tile, transposed layout.
#   xt_ref  : (2, T)  bf16   x^T (features on sublanes, batch on lanes)
#   w1t_ref : (8, 2)  f32    W1^T padded (rows 0..3 = hidden units)
#   b1_ref  : (8, 1)  f32    b1 padded
#   w2_ref  : (8, 1)  f32    w2 column padded
#   b2_ref  : (1, 1)  f32    b2
#   ot_ref  : (1, T)  f32    sigmoid(out)^T  (lane-dense)
# ---------------------------------------------------------------------------
def xornet_kernel(xt_ref, w1t_ref, b1_ref, w2_ref, b2_ref, ot_ref):
    x = xt_ref[...].astype(jnp.float32)          # (2, T) f32
    x0 = x[0:1, :]                               # (1, T)
    x1 = x[1:2, :]                               # (1, T)

    # hidden^T = tanh(W1^T @ x^T + b1): two broadcasted FMAs on the VPU (the
    # MXU is off the critical path for a K=2 contraction).
    h = jnp.tanh(
        w1t_ref[:, 0:1] * x0 + w1t_ref[:, 1:2] * x1 + b1_ref[...]
    )                                            # (8, T) f32, rows 4..7 == 0

    # z^T = w2 . hidden^T + b2: multiply + sublane (XLU) reduction -> (1, T).
    z = jnp.sum(h * w2_ref[...], axis=0, keepdims=True) + b2_ref[...]

    # sigmoid(z) = 0.5 * tanh(0.5 * z) + 0.5  (bounded, single EUP pass).
    ot_ref[...] = (0.5 * jnp.tanh(0.5 * z) + 0.5).astype(ot_ref.dtype)


# ---------------------------------------------------------------------------
# One-time parameter preparation (hoisted out of the per-call path).
# ---------------------------------------------------------------------------
def prepare_params(w1, b1, w2, b2):
    """w1:(2,4) b1:(4,) w2:(4,1) b2:(1,) -> padded/transposed kernel params."""
    in_f, hid = w1.shape
    w1t = jnp.zeros((_FPAD, in_f), jnp.float32)
    w1t = w1t.at[:hid, :].set(w1.T.astype(jnp.float32))           # (8, 2)
    b1p = jnp.zeros((_FPAD, 1), jnp.float32).at[:hid, 0].set(
        b1.astype(jnp.float32))                                   # (8, 1)
    w2p = jnp.zeros((_FPAD, 1), jnp.float32).at[:hid, :].set(
        w2.astype(jnp.float32))                                   # (8, 1)
    b2p = b2.reshape(1, 1).astype(jnp.float32)                    # (1, 1)
    return w1t, b1p, w2p, b2p


# ---------------------------------------------------------------------------
# Forward wrapper: build lane-dense x^T (2 rows only), run gridded kernel.
# ---------------------------------------------------------------------------
@jax.jit
def xornet_forward(x, w1t_p, b1_p, w2_p, b2_p):
    """x: (B, 2) f32. Returns sigmoid output (B, 1) f32."""
    B, in_f = x.shape

    Bp_min = _round_up(B, _LANE)
    if Bp_min <= _LANE:
        tile = _LANE
    else:
        # Aim for >= 4 grid steps on big batches (2 per TensorCore on v7x)
        # while capping the tile so double-buffered blocks stay VMEM-friendly.
        tile = min(_TILE_MAX, max(_LANE, _round_up(Bp_min // 4, _LANE)))
    Bp = _round_up(B, tile)

    # x^T with only the 2 real feature rows in HBM (batch on lanes), bf16.
    xt = jnp.zeros((in_f, Bp), jnp.bfloat16)
    xt = xt.at[:, :B].set(x.astype(jnp.bfloat16).T)

    out_t = pl.pallas_call(
        xornet_kernel,
        out_shape=jax.ShapeDtypeStruct((1, Bp), jnp.float32),
        grid_spec=pltpu.PrefetchScalarGridSpec(
            num_scalar_prefetch=0,
            grid=(Bp // tile,),
            in_specs=[
                pl.BlockSpec((in_f, tile), lambda i: (0, i)),   # x^T tile
                pl.BlockSpec((_FPAD, in_f), lambda i: (0, 0)),  # W1^T (resident)
                pl.BlockSpec((_FPAD, 1), lambda i: (0, 0)),     # b1   (resident)
                pl.BlockSpec((_FPAD, 1), lambda i: (0, 0)),     # w2   (resident)
                pl.BlockSpec((1, 1), lambda i: (0, 0)),         # b2   (resident)
            ],
            out_specs=pl.BlockSpec((1, tile), lambda i: (0, i)),  # lane-dense
        ),
        compiler_params=pltpu.CompilerParams(
            dimension_semantics=("parallel",),
            vmem_limit_bytes=48 * 1024 * 1024,
            # Let XLA fuse the cast/transpose/pad producer into operand 0.
            allow_input_fusion=[True, False, False, False, False],
        ),
    )(xt, w1t_p, b1_p, w2_p, b2_p)

    # Row 0 holds the real output; slice + reshape (no transpose copy).
    return out_t[0, :B].reshape(B, 1)


# ---------------------------------------------------------------------------
# Deterministic parameter init (PyTorch nn.Linear-style uniform(-1/sqrt(fan_in)))
# ---------------------------------------------------------------------------
def init_params(key):
    k1, k2, k3, k4 = jax.random.split(key, 4)
    bound1 = 1.0 / jnp.sqrt(2.0)   # fan_in = 2
    bound2 = 1.0 / jnp.sqrt(4.0)   # fan_in = 4
    w1 = jax.random.uniform(k1, (2, 4), jnp.float32, -bound1, bound1)
    b1 = jax.random.uniform(k2, (4,), jnp.float32, -bound1, bound1)
    w2 = jax.random.uniform(k3, (4, 1), jnp.float32, -bound2, bound2)
    b2 = jax.random.uniform(k4, (1,), jnp.float32, -bound2, bound2)
    return w1, b1, w2, b2


def _reference(x, w1, b1, w2, b2):
    return jax.nn.sigmoid(jnp.tanh(x @ w1 + b1) @ w2 + b2)


if __name__ == "__main__":
    key = jax.random.PRNGKey(0)
    w1, b1, w2, b2 = init_params(key)
    params = prepare_params(w1, b1, w2, b2)   # padded once, reused every call

    # Classic XOR inputs, batch of 4, 2 features each.
    x = jnp.array([[0.0, 0.0], [0.0, 1.0], [1.0, 0.0], [1.0, 1.0]], jnp.float32)
    out = xornet_forward(x, *params)
    jax.block_until_ready(out)

    ref = _reference(x, w1, b1, w2, b2)
    assert out.shape == (4, 1)
    assert jnp.allclose(out, ref, atol=2e-2), (out, ref)

    # Larger batch: exercises multiple grid steps + lane padding (B=300 -> 3 tiles).
    xb = jax.random.uniform(jax.random.PRNGKey(1), (300, 2), jnp.float32)
    outb = xornet_forward(xb, *params)
    jax.block_until_ready(outb)
    refb = _reference(xb, w1, b1, w2, b2)
    assert outb.shape == (300, 1)
    assert jnp.allclose(outb, refb, atol=2e-2), float(jnp.max(jnp.abs(outb - refb)))

    print("KERNEL_OK")
</pallas_src>

<mosaic_0001>
module attributes {stable_mosaic.version = 11 : i64} {
  func.func @xornet_kernel(%arg0: i32, %arg1: memref<2x128xbf16, #tpu.memory_space<vmem>>, %arg2: memref<8x2xf32, #tpu.memory_space<vmem>>, %arg3: memref<8x1xf32, #tpu.memory_space<vmem>>, %arg4: memref<8x1xf32, #tpu.memory_space<vmem>>, %arg5: memref<1x1xf32, #tpu.memory_space<vmem>>, %arg6: memref<1x128xf32, #tpu.memory_space<vmem>>) attributes {dimension_semantics = [#tpu.dimension_semantics<parallel>], iteration_bounds = array<i64: 1>, scalar_prefetch = 0 : i64, scratch_operands = 0 : i64, tpu.core_type = #tpu.core_type<tc>, window_params = [{transform_indices = @transform_0, window_bounds = array<i64: 2, 128>}, {pipeline_mode = #tpu.pipeline_mode<synchronous>, transform_indices = @transform_1, window_bounds = array<i64: 8, 2>}, {pipeline_mode = #tpu.pipeline_mode<synchronous>, transform_indices = @transform_2, window_bounds = array<i64: 8, 1>}, {pipeline_mode = #tpu.pipeline_mode<synchronous>, transform_indices = @transform_3, window_bounds = array<i64: 8, 1>}, {pipeline_mode = #tpu.pipeline_mode<synchronous>, transform_indices = @transform_4, window_bounds = array<i64: 1, 1>}, {transform_indices = @transform_5, window_bounds = array<i64: 1, 128>}]} {
    %c0 = arith.constant 0 : index
    %c0_0 = arith.constant 0 : index
    %0 = vector.load %arg1[%c0, %c0_0] : memref<2x128xbf16, #tpu.memory_space<vmem>>, vector<2x128xbf16>
    %1 = arith.extf %0 : vector<2x128xbf16> to vector<2x128xf32>
    %2 = vector.extract_strided_slice %1 {offsets = [0, 0], sizes = [1, 128], strides = [1, 1]} : vector<2x128xf32> to vector<1x128xf32>
    %3 = vector.extract_strided_slice %1 {offsets = [1, 0], sizes = [1, 128], strides = [1, 1]} : vector<2x128xf32> to vector<1x128xf32>
    %c0_1 = arith.constant 0 : index
    %c0_2 = arith.constant 0 : index
    %4 = vector.load %arg2[%c0_1, %c0_2] : memref<8x2xf32, #tpu.memory_space<vmem>>, vector<8x1xf32>
    %5 = vector.broadcast %4 : vector<8x1xf32> to vector<8x128xf32>
    %6 = vector.broadcast %2 : vector<1x128xf32> to vector<8x128xf32>
    %7 = arith.mulf %5, %6 : vector<8x128xf32>
    %c0_3 = arith.constant 0 : index
    %c1 = arith.constant 1 : index
    %8 = vector.load %arg2[%c0_3, %c1] : memref<8x2xf32, #tpu.memory_space<vmem>>, vector<8x1xf32>
    %9 = vector.broadcast %8 : vector<8x1xf32> to vector<8x128xf32>
    %10 = vector.broadcast %3 : vector<1x128xf32> to vector<8x128xf32>
    %11 = arith.mulf %9, %10 : vector<8x128xf32>
    %12 = arith.addf %7, %11 : vector<8x128xf32>
    %c0_4 = arith.constant 0 : index
    %c0_5 = arith.constant 0 : index
    %13 = vector.load %arg3[%c0_4, %c0_5] : memref<8x1xf32, #tpu.memory_space<vmem>>, vector<8x1xf32>
    %14 = vector.broadcast %13 : vector<8x1xf32> to vector<8x128xf32>
    %15 = arith.addf %12, %14 : vector<8x128xf32>
    %16 = math.tanh %15 : vector<8x128xf32>
    %c0_6 = arith.constant 0 : index
    %c0_7 = arith.constant 0 : index
    %17 = vector.load %arg4[%c0_6, %c0_7] : memref<8x1xf32, #tpu.memory_space<vmem>>, vector<8x1xf32>
    %18 = vector.broadcast %17 : vector<8x1xf32> to vector<8x128xf32>
    %19 = arith.mulf %16, %18 : vector<8x128xf32>
    %cst = arith.constant dense<0.000000e+00> : vector<128xf32>
    %20 = vector.multi_reduction <add>, %19, %cst [0] : vector<8x128xf32> to vector<128xf32>
    %21 = vector.shape_cast %20 : vector<128xf32> to vector<1x128xf32>
    %c0_8 = arith.constant 0 : index
    %c0_9 = arith.constant 0 : index
    %22 = vector.load %arg5[%c0_8, %c0_9] : memref<1x1xf32, #tpu.memory_space<vmem>>, vector<1x1xf32>
    %23 = vector.broadcast %22 : vector<1x1xf32> to vector<1x128xf32>
    %24 = arith.addf %21, %23 : vector<1x128xf32>
    %cst_10 = arith.constant 5.000000e-01 : f32
    %25 = vector.broadcast %cst_10 : f32 to vector<1x128xf32>
    %26 = arith.mulf %25, %24 : vector<1x128xf32>
    %27 = math.tanh %26 : vector<1x128xf32>
    %cst_11 = arith.constant 5.000000e-01 : f32
    %28 = vector.broadcast %cst_11 : f32 to vector<1x128xf32>
    %29 = arith.mulf %28, %27 : vector<1x128xf32>
    %cst_12 = arith.constant 5.000000e-01 : f32
    %30 = vector.broadcast %cst_12 : f32 to vector<1x128xf32>
    %31 = arith.addf %29, %30 : vector<1x128xf32>
    %c0_13 = arith.constant 0 : index
    %c0_14 = arith.constant 0 : index
    %32 = vector.load %arg6[%c0_13, %c0_14] : memref<1x128xf32, #tpu.memory_space<vmem>>, vector<1x128xf32>
    tpu.vector_store %arg6[%c0_13, %c0_14], %31 {strides = array<i32>} : memref<1x128xf32, #tpu.memory_space<vmem>>, vector<1x128xf32>,
    return
  }
  func.func @transform_0(%arg0: i32) -> (i32, i32) {
    %c0_i32 = arith.constant 0 : i32
    %c0_i32_0 = arith.constant 0 : i32
    return %c0_i32, %arg0 : i32, i32
  }
  func.func @transform_1(%arg0: i32) -> (i32, i32) {
    %c0_i32 = arith.constant 0 : i32
    %c0_i32_0 = arith.constant 0 : i32
    %c0_i32_1 = arith.constant 0 : i32
    return %c0_i32, %c0_i32_0 : i32, i32
  }
  func.func @transform_2(%arg0: i32) -> (i32, i32) {
    %c0_i32 = arith.constant 0 : i32
    %c0_i32_0 = arith.constant 0 : i32
    %c0_i32_1 = arith.constant 0 : i32
    return %c0_i32, %c0_i32_0 : i32, i32
  }
  func.func @transform_3(%arg0: i32) -> (i32, i32) {
    %c0_i32 = arith.constant 0 : i32
    %c0_i32_0 = arith.constant 0 : i32
    %c0_i32_1 = arith.constant 0 : i32
    return %c0_i32, %c0_i32_0 : i32, i32
  }
  func.func @transform_4(%arg0: i32) -> (i32, i32) {
    %c0_i32 = arith.constant 0 : i32
    %c0_i32_0 = arith.constant 0 : i32
    %c0_i32_1 = arith.constant 0 : i32
    return %c0_i32, %c0_i32_0 : i32, i32
  }
  func.func @transform_5(%arg0: i32) -> (i32, i32) {
    %c0_i32 = arith.constant 0 : i32
    %c0_i32_0 = arith.constant 0 : i32
    return %c0_i32, %arg0 : i32, i32
  }
}

</mosaic_0001>

<llo_original>
// kernel: xornet_forward.2
$region0: #{xornet_forward.2}
  #allocation0 [shape = 'u32[]', space=smem, size = 0x4, offset = 0x4, fixed_abs, tag = 'smem constant byte address 0x4 - core index']
  #allocation1 [shape = 'u32[144,128]{1,0:T(1,128)}', space=vmem, size = 0x12000, scoped, tag = 'internal scratch']
  #allocation2 [shape = 'u32[2048]{0}', space=vmem, size = 0x2000, scoped, tag = 'scoped memory for xornet_forward.2']
  #allocation3 [shape = 'u32[2048]{0}', space=vmem, size = 0x2000, scoped, tag = 'scoped memory for xornet_forward.2']
  #allocation4 [shape = 'u32[2048]{0}', space=vmem, size = 0x2000, scoped, tag = 'scoped memory for xornet_forward.2']
  #allocation5 [shape = 'u32[2048]{0}', space=vmem, size = 0x2000, scoped, tag = 'scoped memory for xornet_forward.2']
  #allocation6 [shape = 'u32[2048]{0}', space=vmem, size = 0x2000, scoped, tag = 'scoped memory for xornet_forward.2']
  #allocation7 [shape = 'f32[1,1]{1,0:T(1,128)S(1)}', space=vmem, size = 0x200, scoped, tag = 'scoped memory for xornet_forward.2']
  %s0 = inlined_call_operand.vmem [shape: f32[8,2], index: 0, kind: input, shape index: {}]
  %s1 = inlined_call_operand.vmem [shape: f32[8,1], index: 1, kind: input, shape index: {}]
  %s2 = inlined_call_operand.vmem [shape: f32[8,1], index: 2, kind: input, shape index: {}]
  %s3 = inlined_call_operand.<no memory space> [shape: f32[1,1], index: 3, kind: input, shape index: {}]
  %s4 = inlined_call_operand.vmem [shape: bf16[2,4], index: 4, kind: input, shape index: {}]
  %s5 = inlined_call_operand.<no memory space> [shape: bf16[], index: 5, kind: input, shape index: {}]
  %s6 = inlined_call_operand.vmem [shape: f32[1,128], index: 6, kind: output, shape index: {}]
  %s7 = sld [smem:[#allocation0]]
  $region30: #{xornet_forward.2} parent=0
    _
  %s9 = ssub.s32 1, %s7
  %s10 = scalar_select 0, %s9, %s7
  %v11 = vstv %s5
  %v12 = vunpack.i.l.bf16 %v11
  %v14 = vunpack.i.h.bf16 %v11
  %v16 = vstv %s3
  %17 = vst [vmem:[#allocation7] sm:$0x1] %v16
  $region1: #{xornet_forward.2} parent=0
    #allocation8 [shape = 'u8[512]{0}', space=vmem, size = 0x400, dematerialized = true, scoped, tag = 'FusionAdapter Buffer %fusion.2 = bf16[2,128]{1,0:T(2,128)(2,1)} fusion(%param_4.1, %param_5), kind=kLoop, calls=%fused_computation.4.clone, metadata={op_name="jit(xornet_forward)/scatter" stack_frame_id=9}']
    // Predicated region
    $region2: #{xornet_forward.2} parent=1 // pred_check
      _
    $region3: #{xornet_forward.2} parent=1 // pred_check_branch
      %19 = sbr.rel (0) target = $region5
    $region4: #{xornet_forward.2} parent=1 // pred_region
      _
    $region5: #{xornet_forward.2} parent=1 // pred_fallthru
      _
    // Predicated region
    $region6: #{xornet_forward.2} parent=1 // pred_check
      _
    $region7: #{xornet_forward.2} parent=1 // pred_check_branch
      %21 = sbr.rel (0) target = $region9
    $region8: #{xornet_forward.2} parent=1 // pred_region
      _
    $region9: #{xornet_forward.2} parent=1 // pred_fallthru
      _
    // Predicated region
    $region10: #{xornet_forward.2} parent=1 // pred_check
      _
    $region11: #{xornet_forward.2} parent=1 // pred_check_branch
      %23 = sbr.rel (0) target = $region13
    $region12: #{xornet_forward.2} parent=1 // pred_region
      _
    $region13: #{xornet_forward.2} parent=1 // pred_fallthru
      _
    // Predicated region
    $region14: #{xornet_forward.2} parent=1 // pred_check
      _
    $region15: #{xornet_forward.2} parent=1 // pred_check_branch
      %25 = sbr.rel (0) target = $region17
    $region16: #{xornet_forward.2} parent=1 // pred_region
      _
    $region17: #{xornet_forward.2} parent=1 // pred_fallthru
      _
    // Predicated region
    $region18: #{xornet_forward.2} parent=1 // pred_check
      _
    $region19: #{xornet_forward.2} parent=1 // pred_check_branch
      %27 = sbr.rel (0) target = $region21
    $region20: #{xornet_forward.2} parent=1 // pred_region
      _
    $region21: #{xornet_forward.2} parent=1 // pred_fallthru
      _
    %s29 = sor.u32 3, 1
    %s30 = sand.u32 %s29, 1
    %v31 = vld [vmem:[%s4] sm:%s30]
    %v32 = vunpack.c.l.bf16 %v31
    %v33 = vunpack.c.h.bf16 %v31
    %v34 = vlaneseq
    %v35 = vshrl.u32 %v34, 7
    %vm37 = vcmp.lt.s32.totalorder %v35, 2
    %v38 = vsel %vm37, %v32, %v12
    %v39 = vlaneseq
    %v40 = vand.u32 %v39, 127
    %vm42 = vcmp.lt.s32.totalorder %v40, 4
    %v43 = vsel %vm42, %v38, %v12
    %v44 = vpack.c.bf16 0.0, %v43
    %46 = vst [vmem:[#allocation8] sm:$0x1] %v44
    %v47 = vld [vmem:[#allocation8] sm:$0x1]
    %v48 = vunpack.c.l.bf16 %v47
    %v49 = vld [vmem:[%s0] sm:$0xff]
    %51 = vset.pattern.permute.xlu0 0
    %52 = vperm.xlu0 %51, %v49
    %v53 = vpop.permute.xlu0 %52
    %v55 = vlaneseq
    %v56 = vshrl.u32 %v55, 7
    %v57 = vsub.s32 0, %v56
    %v58 = vrot.slane %v48, %v57
    %v59 = vmul.f32 %v53, %v58
    %60 = vset.pattern.permute.xlu0 1
    %61 = vperm.xlu0 %60, %v49
    %v62 = vpop.permute.xlu0 %61
    %v64 = vlaneseq
    %v65 = vshrl.u32 %v64, 7
    %v66 = vsub.s32 1, %v65
    %v67 = vrot.slane %v48, %v66
    %v68 = vmul.f32 %v62, %v67
    %v69 = vadd.f32 %v59, %v68
    %v70 = vld [vmem:[%s1] sm:$0xff]
    %72 = vset.pattern.permute.xlu0 0
    %73 = vperm.xlu0 %72, %v70
    %v74 = vpop.permute.xlu0 %73
    %v76 = vadd.f32 %v69, %v74
    %v77 = vtanh.pop %v76
    %v78 = vld [vmem:[%s2] sm:$0xff]
    %80 = vset.pattern.permute.xlu0 0
    %81 = vperm.xlu0 %80, %v78
    %v82 = vpop.permute.xlu0 %81
    %v84 = vmul.f32 %v77, %v82
    %v85 = vrot.slane %v84, 4
    %v86 = vadd.f32 %v84, %v85
    %v87 = vrot.slane %v86, 2
    %v88 = vadd.f32 %v86, %v87
    %v89 = vrot.slane %v88, 1
    %v90 = vadd.f32 %v88, %v89
    %v91 = vld [vmem:[#allocation7] sm:$0x1]
    %93 = vset.pattern.permute.xlu0 0
    %94 = vperm.xlu0 %93, %v91
    %v95 = vpop.permute.xlu0 %94
    %v97 = vlaneseq
    %v98 = vshrl.u32 %v97, 7
    %v99 = vsub.s32 0, %v98
    %v100 = vrot.slane %v95, %v99
    %v101 = vadd.f32 %v90, %v100
    %v102 = vmul.f32 %v101, 0.5
    %v103 = vtanh.pop %v102
    %v104 = vmul.f32 %v103, 0.5
    %v105 = vadd.f32 %v104, 0.5
    %106 = vst [vmem:[%s6] sm:$0x1] %v105
    // Predicated region
    $region22: #{xornet_forward.2} parent=1 // pred_check
      _
    $region23: #{xornet_forward.2} parent=1 // pred_check_branch
      %108 = sbr.rel (0) target = $region25
    $region24: #{xornet_forward.2} parent=1 // pred_region
      _
    $region25: #{xornet_forward.2} parent=1 // pred_fallthru
      _
    // Predicated region
    $region26: #{xornet_forward.2} parent=1 // pred_check
      _
    $region27: #{xornet_forward.2} parent=1 // pred_check_branch
      %110 = sbr.rel (0) target = $region29
    $region28: #{xornet_forward.2} parent=1 // pred_region
      _
    $region29: #{xornet_forward.2} parent=1 // pred_fallthru
      _

</llo_original>
